<compile_context>
chip_gen: v6e
topology: v6e:2x2x1
jax: 0.10.0
libtpu: 0.0.40
codegen_flags: <defaults>
</compile_context>

<pallas_src>
import numpy as np
import jax
import jax.numpy as jnp
from jax.experimental import pallas as pl
from jax.experimental.pallas import tpu as pltpu

EPS = 1e-7    # eps in _concrete_dropout
TEMP = 0.1    # tmp in _concrete_dropout


def _round_up(x, m):
    return (x + m - 1) // m * m


def _concrete_dropout_linear_kernel(scal_ref, x_ref, u_ref, w_ref, b_ref, y_ref):
    # Precomputed scalars (SMEM): [logit(p)/temp, 1/temp, 1/(1-p)]
    logit_p_over_t = scal_ref[0]
    inv_temp = scal_ref[1]
    inv_retain = scal_ref[2]

    x = x_ref[...]
    u = u_ref[...]

    # drop_logits = (logit(p) + log(u+eps) - log(1-u+eps)) / temp
    z = logit_p_over_t + (jnp.log(u + EPS) - jnp.log(1.0 - u + EPS)) * inv_temp
    # random_tensor = 1 - sigmoid(z) == sigmoid(-z)  (single EUP op, no extra sub)
    keep = jax.nn.sigmoid(-z)
    # x * random_tensor / retain_prob, scalar divide folded into a multiply
    x_dropped = x * keep * inv_retain

    # Wrapped Linear layer on the MXU: bf16 inputs, f32 accumulation.
    acc = jnp.dot(x_dropped.astype(jnp.bfloat16), w_ref[...],
                  preferred_element_type=jnp.float32)
    y_ref[...] = (acc + b_ref[...]).astype(y_ref.dtype)


def concrete_dropout_linear(x, p_logit, w, b, key, *,
                            weight_regulariser, dropout_regulariser,
                            block_m=None):
    """Forward pass of ConcreteDropout(x, layer=Linear).

    Returns (output, regularisation) exactly like the PyTorch module
    (output = layer(self._concrete_dropout(x)), self.regularisation).
    """
    B, D_in = x.shape
    D_out = w.shape[1]

    # ---- regularisation (parameter-only; computed outside the kernel) ----
    p = jax.nn.sigmoid(p_logit.reshape(()).astype(jnp.float32))
    sum_sq = jnp.sum(w.astype(jnp.float32) ** 2) + jnp.sum(b.astype(jnp.float32) ** 2)
    weights_reg = weight_regulariser * sum_sq / (1.0 - p)
    dropout_reg = p * jnp.log(p) + (1.0 - p) * jnp.log(1.0 - p)
    dropout_reg = dropout_reg * (dropout_regulariser * D_in)   # x[0].numel() == D_in
    regularisation = weights_reg + dropout_reg

    # ---- lane-dense padding: feature dims up to multiples of 128 ----
    d_in_p = _round_up(D_in, 128)
    d_out_p = _round_up(D_out, 128)

    # ---- batch tile: biggest tile whose double-buffered x/u/y stays ~8 MiB
    # (fits v5e's 16 MiB scoped-VMEM default and v7x's 64 MiB physical VMEM) ----
    if block_m is None:
        bytes_per_row = 4 * (2 * d_in_p + d_out_p)      # x + noise + y rows (f32)
        tm = (8 * 1024 * 1024) // (2 * bytes_per_row)
        tm = max(8, min(1024, (tm // 8) * 8))
        block_m = min(tm, _round_up(B, 8))              # never pad tiny batches up
    b_p = _round_up(B, block_m)
    grid_m = b_p // block_m

    # ---- pad operands; weight cast to bf16 for the MXU (mask math stays f32) ----
    xp = jnp.pad(x.astype(jnp.float32), ((0, b_p - B), (0, d_in_p - D_in)))
    wp = jnp.pad(w.astype(jnp.float32),
                 ((0, d_in_p - D_in), (0, d_out_p - D_out))).astype(jnp.bfloat16)
    bp = jnp.pad(b.astype(jnp.float32).reshape(1, D_out),
                 ((0, 0), (0, d_out_p - D_out)))

    # Uniform noise u ~ U[0,1) (torch.rand_like equivalent), one independent draw
    # per padded element so every batch tile gets its own mask.
    # TODO(synk): on real TPU hardware this could use in-kernel pltpu.prng_seed /
    # prng_random_bits (seeded with pl.program_id) to avoid streaming noise from
    # HBM, but those primitives have no CPU/interpret lowering in this sandbox.
    u = jax.random.uniform(key, (b_p, d_in_p), dtype=jnp.float32)

    # ---- scalar params for the kernel (live in SMEM) ----
    logit_p = jnp.log(p + EPS) - jnp.log(1.0 - p + EPS)
    scalars = jnp.stack([logit_p / TEMP,
                         jnp.asarray(1.0 / TEMP, jnp.float32),
                         1.0 / (1.0 - p)]).astype(jnp.float32)

    # ---- explicit VMEM budget with headroom (keeps double-buffering intact) ----
    tile_bytes = block_m * 4 * (2 * d_in_p + d_out_p)
    param_bytes = d_in_p * d_out_p * 2 + d_out_p * 4
    vmem_limit = int(min(64 * 1024 * 1024,
                         2 * (tile_bytes + param_bytes) + (4 << 20)))

    cost = pl.CostEstimate(
        flops=2 * b_p * d_in_p * d_out_p,
        transcendentals=3 * b_p * d_in_p,
        bytes_accessed=4 * b_p * (2 * d_in_p + d_out_p) + 2 * d_in_p * d_out_p)

    y_p = pl.pallas_call(
        _concrete_dropout_linear_kernel,
        grid=(grid_m,),
        in_specs=[
            pl.BlockSpec(memory_space=pltpu.MemorySpace.SMEM),      # scalars
            pl.BlockSpec((block_m, d_in_p), lambda i: (i, 0)),      # x tile
            pl.BlockSpec((block_m, d_in_p), lambda i: (i, 0)),      # noise tile
            pl.BlockSpec((d_in_p, d_out_p), lambda i: (0, 0)),      # W (replicated)
            pl.BlockSpec((1, d_out_p), lambda i: (0, 0)),           # bias (replicated)
        ],
        out_specs=pl.BlockSpec((block_m, d_out_p), lambda i: (i, 0)),
        out_shape=jax.ShapeDtypeStruct((b_p, d_out_p), jnp.float32),
        compiler_params=pltpu.CompilerParams(
            dimension_semantics=("parallel",),
            vmem_limit_bytes=vmem_limit),
        cost_estimate=cost,
    )(scalars, xp, u, wp, bp)

    return y_p[:B, :D_out], regularisation


if __name__ == "__main__":
    key = jax.random.PRNGKey(0)
    B, D_in, D_out = 8, 32, 32
    kx, kw, kb, knoise = jax.random.split(key, 4)

    x = jax.random.normal(kx, (B, D_in), dtype=jnp.float32)

    # ConcreteDropout init: init_min == init_max == 0.1  =>  p_logit = logit(0.1)
    p_logit = jnp.full((1,), float(np.log(0.1) - np.log(1.0 - 0.1)),
                       dtype=jnp.float32)

    # Linear(D_in, D_out) params (PyTorch-style uniform init bounds)
    bound = 1.0 / np.sqrt(D_in)
    w = jax.random.uniform(kw, (D_in, D_out), jnp.float32, -bound, bound)
    b = jax.random.uniform(kb, (1, D_out), jnp.float32, -bound, bound)

    y, reg = concrete_dropout_linear(
        x, p_logit, w, b, knoise,
        weight_regulariser=1e-6, dropout_regulariser=1e-3)
    jax.block_until_ready((y, reg))
    assert y.shape == (B, D_out)
    assert reg.shape == ()
    print("KERNEL_OK")
</pallas_src>

<mosaic_0001>
module attributes {stable_mosaic.version = 11 : i64} {
  func.func @_concrete_dropout_linear_kernel(%arg0: i32, %arg1: memref<3xf32, #tpu.memory_space<smem>>, %arg2: memref<8x128xf32, #tpu.memory_space<vmem>>, %arg3: memref<8x128xf32, #tpu.memory_space<vmem>>, %arg4: memref<128x128xbf16, #tpu.memory_space<vmem>>, %arg5: memref<1x128xf32, #tpu.memory_space<vmem>>, %arg6: memref<8x128xf32, #tpu.memory_space<vmem>>) attributes {dimension_semantics = [#tpu.dimension_semantics<parallel>], iteration_bounds = array<i64: 1>, scalar_prefetch = 0 : i64, scratch_operands = 0 : i64, tpu.core_type = #tpu.core_type<tc>, window_params = [{transform_indices = @transform_0, window_bounds = array<i64: 3>}, {transform_indices = @transform_1, window_bounds = array<i64: 8, 128>}, {transform_indices = @transform_2, window_bounds = array<i64: 8, 128>}, {pipeline_mode = #tpu.pipeline_mode<synchronous>, transform_indices = @transform_3, window_bounds = array<i64: 128, 128>}, {pipeline_mode = #tpu.pipeline_mode<synchronous>, transform_indices = @transform_4, window_bounds = array<i64: 1, 128>}, {transform_indices = @transform_5, window_bounds = array<i64: 8, 128>}]} {
    %c0 = arith.constant 0 : index
    %0 = memref.load %arg1[%c0] : memref<3xf32, #tpu.memory_space<smem>>
    %c1 = arith.constant 1 : index
    %1 = memref.load %arg1[%c1] : memref<3xf32, #tpu.memory_space<smem>>
    %c2 = arith.constant 2 : index
    %2 = memref.load %arg1[%c2] : memref<3xf32, #tpu.memory_space<smem>>
    %c0_0 = arith.constant 0 : index
    %c0_1 = arith.constant 0 : index
    %3 = vector.load %arg2[%c0_0, %c0_1] : memref<8x128xf32, #tpu.memory_space<vmem>>, vector<8x128xf32>
    %c0_2 = arith.constant 0 : index
    %c0_3 = arith.constant 0 : index
    %4 = vector.load %arg3[%c0_2, %c0_3] : memref<8x128xf32, #tpu.memory_space<vmem>>, vector<8x128xf32>
    %cst = arith.constant 1.000000e-07 : f32
    %5 = vector.broadcast %cst : f32 to vector<8x128xf32>
    %6 = arith.addf %4, %5 : vector<8x128xf32>
    %7 = math.log %6 : vector<8x128xf32>
    %cst_4 = arith.constant 1.000000e+00 : f32
    %8 = vector.broadcast %cst_4 : f32 to vector<8x128xf32>
    %9 = arith.subf %8, %4 : vector<8x128xf32>
    %cst_5 = arith.constant 1.000000e-07 : f32
    %10 = vector.broadcast %cst_5 : f32 to vector<8x128xf32>
    %11 = arith.addf %9, %10 : vector<8x128xf32>
    %12 = math.log %11 : vector<8x128xf32>
    %13 = arith.subf %7, %12 : vector<8x128xf32>
    %14 = vector.broadcast %1 : f32 to vector<8x128xf32>
    %15 = arith.mulf %13, %14 : vector<8x128xf32>
    %16 = vector.broadcast %0 : f32 to vector<8x128xf32>
    %17 = arith.addf %16, %15 : vector<8x128xf32>
    %cst_6 = arith.constant 0.000000e+00 : f32
    %18 = vector.broadcast %cst_6 : f32 to vector<8x128xf32>
    %19 = arith.subf %18, %17 : vector<8x128xf32>
    %20 = arith.negf %19 : vector<8x128xf32>
    %21 = math.exp %20 : vector<8x128xf32>
    %cst_7 = arith.constant 1.000000e+00 : f32
    %22 = vector.broadcast %cst_7 : f32 to vector<8x128xf32>
    %23 = arith.addf %22, %21 : vector<8x128xf32>
    %24 = arith.divf %22, %23 : vector<8x128xf32>
    %25 = arith.mulf %3, %24 : vector<8x128xf32>
    %26 = vector.broadcast %2 : f32 to vector<8x128xf32>
    %27 = arith.mulf %25, %26 : vector<8x128xf32>
    %28 = arith.truncf %27 : vector<8x128xf32> to vector<8x128xbf16>
    %c0_8 = arith.constant 0 : index
    %c0_9 = arith.constant 0 : index
    %29 = vector.load %arg4[%c0_8, %c0_9] : memref<128x128xbf16, #tpu.memory_space<vmem>>, vector<128x128xbf16>
    %cst_10 = arith.constant dense<0.000000e+00> : vector<8x128xf32>
    %30 = tpu.matmul %28, %29, %cst_10 {dimension_numbers = #tpu.dot_dimension_numbers<[1], [0], [0], [1], [0, 0, 1, 1], [], []>} : vector<8x128xbf16>, vector<128x128xbf16>, vector<8x128xf32> -> vector<8x128xf32>
    %c0_11 = arith.constant 0 : index
    %c0_12 = arith.constant 0 : index
    %31 = vector.load %arg5[%c0_11, %c0_12] : memref<1x128xf32, #tpu.memory_space<vmem>>, vector<1x128xf32>
    %32 = vector.broadcast %31 : vector<1x128xf32> to vector<8x128xf32>
    %33 = arith.addf %30, %32 : vector<8x128xf32>
    %c0_13 = arith.constant 0 : index
    %c0_14 = arith.constant 0 : index
    %34 = vector.load %arg6[%c0_13, %c0_14] : memref<8x128xf32, #tpu.memory_space<vmem>>, vector<8x128xf32>
    tpu.vector_store %arg6[%c0_13, %c0_14], %33 {strides = array<i32>} : memref<8x128xf32, #tpu.memory_space<vmem>>, vector<8x128xf32>,
    return
  }
  func.func @transform_0(%arg0: i32) -> i32 {
    %c0_i32 = arith.constant 0 : i32
    %c0_i32_0 = arith.constant 0 : i32
    return %c0_i32 : i32
  }
  func.func @transform_1(%arg0: i32) -> (i32, i32) {
    %c0_i32 = arith.constant 0 : i32
    %c0_i32_0 = arith.constant 0 : i32
    return %arg0, %c0_i32 : i32, i32
  }
  func.func @transform_2(%arg0: i32) -> (i32, i32) {
    %c0_i32 = arith.constant 0 : i32
    %c0_i32_0 = arith.constant 0 : i32
    return %arg0, %c0_i32 : i32, i32
  }
  func.func @transform_3(%arg0: i32) -> (i32, i32) {
    %c0_i32 = arith.constant 0 : i32
    %c0_i32_0 = arith.constant 0 : i32
    %c0_i32_1 = arith.constant 0 : i32
    return %c0_i32, %c0_i32_0 : i32, i32
  }
  func.func @transform_4(%arg0: i32) -> (i32, i32) {
    %c0_i32 = arith.constant 0 : i32
    %c0_i32_0 = arith.constant 0 : i32
    %c0_i32_1 = arith.constant 0 : i32
    return %c0_i32, %c0_i32_0 : i32, i32
  }
  func.func @transform_5(%arg0: i32) -> (i32, i32) {
    %c0_i32 = arith.constant 0 : i32
    %c0_i32_0 = arith.constant 0 : i32
    return %arg0, %c0_i32 : i32, i32
  }
}

</mosaic_0001>

<llo_original>
// kernel: tpu_custom_call.1
$region0: #{tpu_custom_call.1}
  #allocation0 [shape = 'u32[]', space=smem, size = 0x4, offset = 0x4, fixed_abs, tag = 'smem constant byte address 0x4 - core index']
  #allocation1 [shape = 'u32[144,128]{1,0:T(1,128)}', space=vmem, size = 0x12000, scoped, tag = 'internal scratch']
  %s0 = inlined_call_operand.hbm [shape: f32[3], index: 0, kind: input, shape index: {}]
  %s1 = inlined_call_operand.hbm [shape: f32[8,128], index: 1, kind: input, shape index: {}]
  %s2 = inlined_call_operand.hbm [shape: f32[8,128], index: 2, kind: input, shape index: {}]
  %s3 = inlined_call_operand.hbm [shape: bf16[128,128], index: 3, kind: input, shape index: {}]
  %s4 = inlined_call_operand.vmem [shape: f32[1,128], index: 4, kind: input, shape index: {}]
  %s5 = inlined_call_operand.hbm [shape: f32[8,128], index: 5, kind: output, shape index: {}]
  %s6 = sld [smem:[#allocation0]]
  $region46: #{tpu_custom_call.1} parent=0
    _
  %s8 = ssub.s32 1, %s6
  %s9 = scalar_select 0, %s8, %s6
  $region1: #{tpu_custom_call.1} parent=0
    #allocation2 [shape = 'u8[512]{0}', space=smem, size = 0x200, scoped, tag = 'input window, operand 0, single buffered']
    #allocation3 [shape = 's32[1]{0}', space=sflag, size = 0x4, scoped, tag = 'scoped memory for tpu_custom_call.1']
    #allocation4 [shape = 's32[1]{0}', space=sflag, size = 0x4, scoped, tag = 'scoped memory for tpu_custom_call.1']
    #allocation5 [shape = 's32[1]{0}', space=sflag, size = 0x4, scoped, tag = 'scoped memory for tpu_custom_call.1']
    #allocation6 [shape = 'u8[4096]{0}', space=vmem, size = 0x1000, scoped, tag = 'input window, operand 1, single buffered']
    #allocation7 [shape = 'u8[4096]{0}', space=vmem, size = 0x1000, scoped, tag = 'input window, operand 2, single buffered']
    #allocation8 [shape = 's32[1]{0}', space=sflag, size = 0x4, scoped, tag = 'scoped memory for tpu_custom_call.1']
    #allocation9 [shape = 'u8[32768]{0}', space=vmem, size = 0x8000, scoped, tag = 'input window, operand 3, single buffered']
    #allocation10 [shape = 'u8[4096]{0}', space=vmem, size = 0x1000, scoped, tag = 'output window, operand 0, single buffered']
    %10 = vsyncpa [#allocation5], 0
    %11 = vsyncpa [#allocation3], 0
    %12 = vsyncpa [#allocation8], 0
    %13 = vsyncpa [#allocation4], 0
    // Predicated region
    $region2: #{tpu_custom_call.1} parent=1 // pred_check
      _
    $region3: #{tpu_custom_call.1} parent=1 // pred_check_branch
      %15 = sbr.rel (0) target = $region5
    $region4: #{tpu_custom_call.1} parent=1 // pred_region
      %s17 = ssub.s32 16, 16
      %18 = vsyncadd [#allocation5], %s17
      %21 = dma.hbm_to_smem %s0, 16, [#allocation2], [#allocation5]
    $region5: #{tpu_custom_call.1} parent=1 // pred_fallthru
      _
    // Predicated region
    $region6: #{tpu_custom_call.1} parent=1 // pred_check
      _
    $region7: #{tpu_custom_call.1} parent=1 // pred_check_branch
      %23 = sbr.rel (0) target = $region9
    $region8: #{tpu_custom_call.1} parent=1 // pred_region
      %s25 = ssub.s32 128, 128
      %26 = vsyncadd [#allocation3], %s25
      %s28 = sshll.u32 [#allocation6], 4
      %s29 = int_to_ptr.vmem [resolvable:$true] %s28
      %31 = dma.hbm_to_vmem [thread:$0]  %s1, 128, %s29, [#allocation3]
    $region9: #{tpu_custom_call.1} parent=1 // pred_fallthru
      _
    // Predicated region
    $region10: #{tpu_custom_call.1} parent=1 // pred_check
      _
    $region11: #{tpu_custom_call.1} parent=1 // pred_check_branch
      %33 = sbr.rel (0) target = $region13
    $region12: #{tpu_custom_call.1} parent=1 // pred_region
      %s35 = ssub.s32 128, 128
      %36 = vsyncadd [#allocation8], %s35
      %s38 = sshll.u32 [#allocation7], 4
      %s39 = int_to_ptr.vmem [resolvable:$true] %s38
      %41 = dma.hbm_to_vmem [thread:$0]  %s2, 128, %s39, [#allocation8]
    $region13: #{tpu_custom_call.1} parent=1 // pred_fallthru
      _
    // Predicated region
    $region14: #{tpu_custom_call.1} parent=1 // pred_check
      _
    $region15: #{tpu_custom_call.1} parent=1 // pred_check_branch
      %43 = sbr.rel (0) target = $region17
    $region16: #{tpu_custom_call.1} parent=1 // pred_region
      %s45 = ssub.s32 1024, 1024
      %46 = vsyncadd [#allocation8], %s45
      %s47 = sshll.u32 [#allocation9], 4
      %s48 = int_to_ptr.vmem [resolvable:$true] %s47
      %53 = dma.hbm_to_vmem [thread:$0]  %s3, 1024, %s48, [#allocation8], 64, 64, 4
    $region17: #{tpu_custom_call.1} parent=1 // pred_fallthru
      _
    // Predicated region
    $region18: #{tpu_custom_call.1} parent=1 // pred_check
      _
    $region19: #{tpu_custom_call.1} parent=1 // pred_check_branch
      %55 = sbr.rel (0) target = $region21
    $region20: #{tpu_custom_call.1} parent=1 // pred_region
      _
    $region21: #{tpu_custom_call.1} parent=1 // pred_fallthru
      _
    // Predicated region
    $region22: #{tpu_custom_call.1} parent=1 // pred_check
      _
    $region23: #{tpu_custom_call.1} parent=1 // pred_check_branch
      %57 = sbr.rel (0) target = $region25
    $region24: #{tpu_custom_call.1} parent=1 // pred_region
      %58 = dma.done [#allocation5], 16
    $region25: #{tpu_custom_call.1} parent=1 // pred_fallthru
      _
    // Predicated region
    $region26: #{tpu_custom_call.1} parent=1 // pred_check
      _
    $region27: #{tpu_custom_call.1} parent=1 // pred_check_branch
      %60 = sbr.rel (0) target = $region29
    $region28: #{tpu_custom_call.1} parent=1 // pred_region
      %61 = dma.done [#allocation3], 128
    $region29: #{tpu_custom_call.1} parent=1 // pred_fallthru
      _
    // Predicated region
    $region30: #{tpu_custom_call.1} parent=1 // pred_check
      _
    $region31: #{tpu_custom_call.1} parent=1 // pred_check_branch
      %63 = sbr.rel (0) target = $region33
    $region32: #{tpu_custom_call.1} parent=1 // pred_region
      %64 = dma.done [#allocation8], 128
    $region33: #{tpu_custom_call.1} parent=1 // pred_fallthru
      _
    // Predicated region
    $region34: #{tpu_custom_call.1} parent=1 // pred_check
      _
    $region35: #{tpu_custom_call.1} parent=1 // pred_check_branch
      %66 = sbr.rel (0) target = $region37
    $region36: #{tpu_custom_call.1} parent=1 // pred_region
      %67 = dma.done [#allocation8], 1024
    $region37: #{tpu_custom_call.1} parent=1 // pred_fallthru
      _
    %68 = sfence
    %s70 = sld [smem:[#allocation2]]
    %s71 = sld [smem:[#allocation2 + $0x1]]
    %s72 = sld [smem:[#allocation2 + $0x2]]
    %v73 = vld [vmem:[#allocation6] sm:$0xff]
    %v74 = vld [vmem:[#allocation7] sm:$0xff]
    %v75 = vadd.f32 %v74, 1e-07
    %v76 = vlog2.pop %v75
    %v77 = vmul.f32 %v76, 0.6931472
    %v78 = vsub.f32 1.0, %v74
    %v79 = vadd.f32 %v78, 1e-07
    %v80 = vlog2.pop %v79
    %v81 = vmul.f32 %v80, 0.6931472
    %v82 = vsub.f32 %v77, %v81
    %v83 = vstv %s71
    %v84 = vmul.f32 %v82, %v83
    %v85 = vstv %s70
    %v86 = vadd.f32 %v85, %v84
    %v87 = vsub.f32 0.0, %v86
    %v88 = vxor.u32 %v87, 2147483648
    %v89 = vmul.f32 %v88, 1.442695
    %v90 = vpow.pop %v89
    %v91 = vadd.f32 %v90, 1.0
    %v92 = vrcp.pop %v91
    %v93 = vmul.f32 1.0, %v92
    %v94 = vmul.f32 %v73, %v93
    %v95 = vstv %s72
    %v96 = vmul.f32 %v94, %v95
    %v97 = vpack.c.bf16 %v96, %v96
    %v98 = vld [vmem:[#allocation9] sm:$0xf]
    %v99 = vld [vmem:[#allocation9 + $0x4] sm:$0xf]
    %v100 = vld [vmem:[#allocation9 + $0x8] sm:$0xf]
    %v101 = vld [vmem:[#allocation9 + $0xc] sm:$0xf]
    %v102 = vld [vmem:[#allocation9 + $0x10] sm:$0xf]
    %v103 = vld [vmem:[#allocation9 + $0x14] sm:$0xf]
    %v104 = vld [vmem:[#allocation9 + $0x18] sm:$0xf]
    %v105 = vld [vmem:[#allocation9 + $0x1c] sm:$0xf]
    %v106 = vld [vmem:[#allocation9 + $0x20] sm:$0xf]
    %v107 = vld [vmem:[#allocation9 + $0x24] sm:$0xf]
    %v108 = vld [vmem:[#allocation9 + $0x28] sm:$0xf]
    %v109 = vld [vmem:[#allocation9 + $0x2c] sm:$0xf]
    %v110 = vld [vmem:[#allocation9 + $0x30] sm:$0xf]
    %v111 = vld [vmem:[#allocation9 + $0x34] sm:$0xf]
    %v112 = vld [vmem:[#allocation9 + $0x38] sm:$0xf]
    %v113 = vld [vmem:[#allocation9 + $0x3c] sm:$0xf]
    %v114 = vld [vmem:[%s4] sm:$0x1]
    %v116 = vlaneseq
    %v117 = vshrl.u32 %v116, 7
    %v118 = vsub.s32 0, %v117
    %v119 = vrot.slane %v114, %v118
    %v137 = vunpack.c.l.b16 %v98
    %v138 = vunpack.c.l.b16 %v99
    %v139 = vunpack.c.l.b16 %v100
    %v140 = vunpack.c.l.b16 %v101
    %v141 = vunpack.c.l.b16 %v102
    %v142 = vunpack.c.l.b16 %v103
    %v143 = vunpack.c.l.b16 %v104
    %v144 = vunpack.c.l.b16 %v105
    %v145 = vunpack.c.l.b16 %v106
    %v146 = vunpack.c.l.b16 %v107
    %v147 = vunpack.c.l.b16 %v108
    %v148 = vunpack.c.l.b16 %v109
    %v149 = vunpack.c.l.b16 %v110
    %v150 = vunpack.c.l.b16 %v111
    %v151 = vunpack.c.l.b16 %v112
    %v152 = vunpack.c.l.b16 %v113
    %v153 = vpack.c.b16 %v138, %v137
    %v154 = vpack.c.b16 %v140, %v139
    %v155 = vpack.c.b16 %v142, %v141
    %v156 = vpack.c.b16 %v144, %v143
    %v157 = vpack.c.b16 %v146, %v145
    %v158 = vpack.c.b16 %v148, %v147
    %v159 = vpack.c.b16 %v150, %v149
    %v160 = vpack.c.b16 %v152, %v151
    %169 = vmatprep.subr.bf16.mxu0 0
    %170 = vmatpush1.bf16.msra.mxu0 %v160
    %171 = vmatprep.subr.bf16.mxu0 0
    %172 = vmatpush1.bf16.msra.mxu0 %v159
    %173 = vmatprep.subr.bf16.mxu0 0
    %174 = vmatpush1.bf16.msra.mxu0 %v158
    %175 = vmatprep.subr.bf16.mxu0 0
    %176 = vmatpush1.bf16.msra.mxu0 %v157
    %177 = vmatprep.subr.bf16.mxu0 0
    %178 = vmatpush1.bf16.msra.mxu0 %v156
    %179 = vmatprep.subr.bf16.mxu0 0
    %180 = vmatpush1.bf16.msra.mxu0 %v155
    %181 = vmatprep.subr.bf16.mxu0 0
    %182 = vmatpush1.bf16.msra.mxu0 %v154
    %183 = vmatprep.subr.bf16.mxu0 0
    %184 = vmatpush1.bf16.msra.mxu0 %v153
    %185 = vmatprep.subr.bf16.mxu0 0
    %186 = vmatpush2.bf16.msra.mxu0 0
    %187 = vmatprep.subr.bf16.mxu0 0
    %188 = vmatpush2.bf16.msra.mxu0 0
    %189 = vmatprep.subr.bf16.mxu0 0
    %190 = vmatpush2.bf16.msra.mxu0 0
    %191 = vmatprep.subr.bf16.mxu0 0
    %192 = vmatpush2.bf16.msra.mxu0 0
    %193 = vmatprep.subr.bf16.mxu0 0
    %194 = vmatpush2.bf16.msra.mxu0 0
    %195 = vmatprep.subr.bf16.mxu0 0
    %196 = vmatpush2.bf16.msra.mxu0 0
    %197 = vmatprep.subr.bf16.mxu0 0
    %198 = vmatpush2.bf16.msra.mxu0 0
    %199 = vmatprep.subr.bf16.mxu0 0
    %200 = vmatpush2.bf16.msra.mxu0 0
    %201 = vmatprep.mubr.bf16.mxu0 0
    %202 = vmatmul.mubr.bf16.gmra.mxu0 %v97
    %v203 = vpop.f32.mrf.mxu0
    %v204 = vadd.f32 %v119, %v203
    %v205 = vpop.f32.mrf.mxu0
    %v206 = vpop.f32.mrf.mxu0
    %v207 = vpop.f32.mrf.mxu0
    %208 = vdwg.mxu0
    %209 = vst [vmem:[#allocation10] sm:$0xff] %v204
    // Predicated region
    $region38: #{tpu_custom_call.1} parent=1 // pred_check
      _
    $region39: #{tpu_custom_call.1} parent=1 // pred_check_branch
      %211 = sbr.rel (0) target = $region41
    $region40: #{tpu_custom_call.1} parent=1 // pred_region
      %s213 = ssub.s32 128, 128
      %214 = vsyncadd [#allocation4], %s213
      %s216 = sshll.u32 [#allocation10], 4
      %s217 = int_to_ptr.vmem [resolvable:$true] %s216
      %219 = dma.vmem_to_hbm [thread:$0]  %s217, 128, %s5, [#allocation4]
    $region41: #{tpu_custom_call.1} parent=1 // pred_fallthru
      _
    // Predicated region
    $region42: #{tpu_custom_call.1} parent=1 // pred_check
      _
    $region43: #{tpu_custom_call.1} parent=1 // pred_check_branch
      %221 = sbr.rel (0) target = $region45
    $region44: #{tpu_custom_call.1} parent=1 // pred_region
      %222 = dma.done [#allocation4], 128
    $region45: #{tpu_custom_call.1} parent=1 // pred_fallthru
      _
    %223 = vsyncpa [#allocation3], 1
    %224 = vsyncpa [#allocation8], 1
    %225 = vsyncpa [#allocation4], 1
    %226 = vsyncpa [#allocation5], 1

</llo_original>
